<compile_context>
chip_gen: v7x
topology: tpu7x:2x2x1
jax: 0.10.0
libtpu: 0.0.40
codegen_flags: <defaults>
</compile_context>

<pallas_src>
import functools

import jax
import jax.numpy as jnp
from jax.experimental import pallas as pl
from jax.experimental.pallas import tpu as pltpu

H1_PAD = 1024   # hidden 1000 padded to a lane-dense multiple of 128
H2_PAD = 128    # hidden 10 padded to one full vreg lane width


def _smoking_kernel(x_ref, w1a_ref, w1b_ref, b1_ref, w2_ref, b2_ref,
                    w3_ref, b3_ref, o_ref, *, matmul_dtype):
    # TODO(synk): Dropout(0.2, inplace=True) is identity at inference; training-mode
    # dropout is not modeled.
    x = x_ref[...].astype(jnp.float32)

    s = jax.nn.sigmoid(x)            # (B_TILE, NI)   -- EUP
    sq = jnp.sqrt(s)                 # SqrtLayer

    # concat([sq, s], axis=1) @ W1  ==  sq @ W1[:NI] + s @ W1[NI:]
    # Two accumulating MXU matmuls avoid the lane-axis concat / relayout copy.
    h1 = jnp.dot(sq.astype(matmul_dtype), w1a_ref[...],
                 preferred_element_type=jnp.float32)
    h1 = h1 + jnp.dot(s.astype(matmul_dtype), w1b_ref[...],
                      preferred_element_type=jnp.float32)
    h1 = jnp.maximum(h1 + b1_ref[...], 0.0)           # (B_TILE, 1024)

    h2 = jnp.dot(h1.astype(matmul_dtype), w2_ref[...],
                 preferred_element_type=jnp.float32) + b2_ref[...]
    h2 = jnp.maximum(h2, 0.0)                          # (B_TILE, 128)

    # Final (padded 10 -> 1) layer on the VPU/XLU: elementwise mul + lane reduce
    # instead of a K=10, single-lane masked MXU tile.
    h3 = jnp.sum(h2 * w3_ref[...], axis=-1, keepdims=True) + b3_ref[...]
    out = jax.nn.sigmoid(h3)                           # (B_TILE, 1)

    # Lane-dense store: broadcast the per-row result across all 128 lanes so the
    # writeback uses full (unmasked) vector stores; the wrapper slices column 0.
    o_ref[...] = jnp.broadcast_to(out, o_ref.shape).astype(o_ref.dtype)


def _round_up(v, m):
    return ((v + m - 1) // m) * m


def pack_params(params, matmul_dtype=jnp.bfloat16):
    """Zero-pads and splits the logical (1000 / 10 / 1) weights for the kernel."""
    w1, b1, w2, b2, w3, b3 = params
    ni2, h1 = w1.shape            # (2*NI, 1000)
    ni = ni2 // 2
    h2 = w2.shape[1]              # 10

    w1p = jnp.zeros((ni2, H1_PAD), jnp.float32).at[:, :h1].set(w1)
    w1a = w1p[:ni].astype(matmul_dtype)          # multiplies sqrt(sigmoid(x))
    w1b = w1p[ni:].astype(matmul_dtype)          # multiplies sigmoid(x)
    b1p = jnp.zeros((1, H1_PAD), jnp.float32).at[:, :h1].set(b1)

    w2p = jnp.zeros((H1_PAD, H2_PAD), jnp.float32).at[:h1, :h2].set(w2)
    w2p = w2p.astype(matmul_dtype)
    b2p = jnp.zeros((1, H2_PAD), jnp.float32).at[:, :h2].set(b2)

    w3row = jnp.zeros((1, H2_PAD), jnp.float32).at[:, :h2].set(w3.T)   # (1, 128)
    b3p = b3.reshape(1, 1).astype(jnp.float32)
    return w1a, w1b, b1p, w2p, b2p, w3row, b3p


def smoking_model_forward(x, params, *, batch_tile=512,
                          matmul_dtype=jnp.bfloat16):
    """Fused forward pass; batch is tiled over a 'parallel' grid axis.

    `batch_tile=512` keeps per-step VMEM (x block, f32 h1 of B_TILE x 1024,
    ~2 MiB bf16 weights) comfortably inside even v7x's 64 MiB / default scoped
    budget while still amortizing the ~0.35 us/step grid overhead.  On v5e use
    `matmul_dtype=jnp.float32` if bf16 is undesired; elementwise math is f32
    everywhere regardless.
    """
    B, NI = x.shape
    packed = pack_params(params, matmul_dtype)
    w1a, w1b, b1p, w2p, b2p, w3row, b3p = packed

    b_tile = _round_up(min(batch_tile, _round_up(B, 8)), 8)
    b_pad = _round_up(B, b_tile)
    if b_pad != B:
        x = jnp.pad(x, ((0, b_pad - B), (0, 0)))
    grid = (b_pad // b_tile,)

    const2 = lambda i: (0, 0)

    flops = b_pad * (4 * NI * H1_PAD + 2 * H1_PAD * H2_PAD + 4 * H2_PAD)
    transcendentals = b_pad * (2 * NI + 1)
    bytes_accessed = (x.size * x.dtype.itemsize
                      + sum(int(p.size) * p.dtype.itemsize for p in packed)
                      + b_pad * H2_PAD * 4)

    out = pl.pallas_call(
        functools.partial(_smoking_kernel, matmul_dtype=matmul_dtype),
        out_shape=jax.ShapeDtypeStruct((b_pad, H2_PAD), jnp.float32),
        grid=grid,
        in_specs=[
            pl.BlockSpec((b_tile, NI), lambda i: (i, 0)),   # batch-tiled, pipelined
            pl.BlockSpec(w1a.shape, const2),                # weights resident
            pl.BlockSpec(w1b.shape, const2),
            pl.BlockSpec(b1p.shape, const2),
            pl.BlockSpec(w2p.shape, const2),
            pl.BlockSpec(b2p.shape, const2),
            pl.BlockSpec(w3row.shape, const2),
            pl.BlockSpec(b3p.shape, const2),
        ],
        out_specs=pl.BlockSpec((b_tile, H2_PAD), lambda i: (i, 0)),
        compiler_params=pltpu.CompilerParams(
            dimension_semantics=("parallel",)),
        cost_estimate=pl.CostEstimate(
            flops=flops, transcendentals=transcendentals,
            bytes_accessed=bytes_accessed),
    )(x, w1a, w1b, b1p, w2p, b2p, w3row, b3p)

    return out[:B, :1]


def init_params(key, num_inputs):
    """Deterministic PyTorch-style (uniform +-1/sqrt(fan_in)) initialization."""
    dims = [(2 * num_inputs, 1000), (1000, 10), (10, 1)]
    params = []
    for (fan_in, fan_out) in dims:
        key, kw, kb = jax.random.split(key, 3)
        bound = 1.0 / jnp.sqrt(float(fan_in))
        w = jax.random.uniform(kw, (fan_in, fan_out), jnp.float32, -bound, bound)
        b = jax.random.uniform(kb, (1, fan_out), jnp.float32, -bound, bound)
        params += [w, b]
    return tuple(params)


def reference_forward(x, params, bf16_matmul=False):
    """Pure-JAX reference of the PyTorch forward (inference)."""
    w1, b1, w2, b2, w3, b3 = params
    s = jax.nn.sigmoid(x)
    combined = jnp.concatenate([jnp.sqrt(s), s], axis=1)

    def mm(a, w):
        if bf16_matmul:
            a = a.astype(jnp.bfloat16)
            w = w.astype(jnp.bfloat16)
        return jnp.dot(a, w, preferred_element_type=jnp.float32)

    h1 = jnp.maximum(mm(combined, w1) + b1, 0.0)
    h2 = jnp.maximum(mm(h1, w2) + b2, 0.0)
    h3 = h2 @ w3 + b3          # final layer kept in f32, matching the kernel
    return jax.nn.sigmoid(h3)


if __name__ == "__main__":
    batch = 8
    num_inputs = 16

    key = jax.random.PRNGKey(0)
    key, kx = jax.random.split(key)
    x = jax.random.normal(kx, (batch, num_inputs), dtype=jnp.float32)
    params = init_params(key, num_inputs)

    out = smoking_model_forward(x, params)
    out = jax.block_until_ready(out)

    ref_matched = reference_forward(x, params, bf16_matmul=True)
    ref_f32 = reference_forward(x, params, bf16_matmul=False)

    assert out.shape == (batch, 1), out.shape
    assert jnp.allclose(out, ref_matched, atol=1e-4, rtol=1e-4), (
        f"max abs err vs dtype-matched ref: {jnp.max(jnp.abs(out - ref_matched))}")
    assert jnp.allclose(out, ref_f32, atol=2e-2, rtol=2e-2), (
        f"max abs err vs f32 ref: {jnp.max(jnp.abs(out - ref_f32))}")

    print("KERNEL_OK")
</pallas_src>

<mosaic_0001>
module attributes {stable_mosaic.version = 11 : i64} {
  func.func @_smoking_kernel(%arg0: i32, %arg1: memref<8x16xf32, #tpu.memory_space<vmem>>, %arg2: memref<16x1024xbf16, #tpu.memory_space<vmem>>, %arg3: memref<16x1024xbf16, #tpu.memory_space<vmem>>, %arg4: memref<1x1024xf32, #tpu.memory_space<vmem>>, %arg5: memref<1024x128xbf16, #tpu.memory_space<vmem>>, %arg6: memref<1x128xf32, #tpu.memory_space<vmem>>, %arg7: memref<1x128xf32, #tpu.memory_space<vmem>>, %arg8: memref<1x1xf32, #tpu.memory_space<vmem>>, %arg9: memref<8x128xf32, #tpu.memory_space<vmem>>) attributes {dimension_semantics = [#tpu.dimension_semantics<parallel>], iteration_bounds = array<i64: 1>, scalar_prefetch = 0 : i64, scratch_operands = 0 : i64, tpu.core_type = #tpu.core_type<tc>, window_params = [{transform_indices = @transform_0, window_bounds = array<i64: 8, 16>}, {pipeline_mode = #tpu.pipeline_mode<synchronous>, transform_indices = @transform_1, window_bounds = array<i64: 16, 1024>}, {pipeline_mode = #tpu.pipeline_mode<synchronous>, transform_indices = @transform_2, window_bounds = array<i64: 16, 1024>}, {pipeline_mode = #tpu.pipeline_mode<synchronous>, transform_indices = @transform_3, window_bounds = array<i64: 1, 1024>}, {pipeline_mode = #tpu.pipeline_mode<synchronous>, transform_indices = @transform_4, window_bounds = array<i64: 1024, 128>}, {pipeline_mode = #tpu.pipeline_mode<synchronous>, transform_indices = @transform_5, window_bounds = array<i64: 1, 128>}, {pipeline_mode = #tpu.pipeline_mode<synchronous>, transform_indices = @transform_6, window_bounds = array<i64: 1, 128>}, {pipeline_mode = #tpu.pipeline_mode<synchronous>, transform_indices = @transform_7, window_bounds = array<i64: 1, 1>}, {transform_indices = @transform_8, window_bounds = array<i64: 8, 128>}]} {
    %c0 = arith.constant 0 : index
    %c0_0 = arith.constant 0 : index
    %0 = vector.load %arg1[%c0, %c0_0] : memref<8x16xf32, #tpu.memory_space<vmem>>, vector<8x16xf32>
    %1 = arith.negf %0 : vector<8x16xf32>
    %2 = math.exp %1 : vector<8x16xf32>
    %cst = arith.constant 1.000000e+00 : f32
    %3 = vector.broadcast %cst : f32 to vector<8x16xf32>
    %4 = arith.addf %3, %2 : vector<8x16xf32>
    %5 = arith.divf %3, %4 : vector<8x16xf32>
    %6 = math.sqrt %5 : vector<8x16xf32>
    %7 = arith.truncf %6 : vector<8x16xf32> to vector<8x16xbf16>
    %c0_1 = arith.constant 0 : index
    %c0_2 = arith.constant 0 : index
    %8 = vector.load %arg2[%c0_1, %c0_2] : memref<16x1024xbf16, #tpu.memory_space<vmem>>, vector<16x1024xbf16>
    %cst_3 = arith.constant dense<0.000000e+00> : vector<8x1024xf32>
    %9 = tpu.matmul %7, %8, %cst_3 {dimension_numbers = #tpu.dot_dimension_numbers<[1], [0], [0], [1], [0, 0, 1, 1], [], []>} : vector<8x16xbf16>, vector<16x1024xbf16>, vector<8x1024xf32> -> vector<8x1024xf32>
    %10 = arith.truncf %5 : vector<8x16xf32> to vector<8x16xbf16>
    %c0_4 = arith.constant 0 : index
    %c0_5 = arith.constant 0 : index
    %11 = vector.load %arg3[%c0_4, %c0_5] : memref<16x1024xbf16, #tpu.memory_space<vmem>>, vector<16x1024xbf16>
    %cst_6 = arith.constant dense<0.000000e+00> : vector<8x1024xf32>
    %12 = tpu.matmul %10, %11, %cst_6 {dimension_numbers = #tpu.dot_dimension_numbers<[1], [0], [0], [1], [0, 0, 1, 1], [], []>} : vector<8x16xbf16>, vector<16x1024xbf16>, vector<8x1024xf32> -> vector<8x1024xf32>
    %13 = arith.addf %9, %12 : vector<8x1024xf32>
    %c0_7 = arith.constant 0 : index
    %c0_8 = arith.constant 0 : index
    %14 = vector.load %arg4[%c0_7, %c0_8] : memref<1x1024xf32, #tpu.memory_space<vmem>>, vector<1x1024xf32>
    %15 = vector.broadcast %14 : vector<1x1024xf32> to vector<8x1024xf32>
    %16 = arith.addf %13, %15 : vector<8x1024xf32>
    %cst_9 = arith.constant 0.000000e+00 : f32
    %17 = vector.broadcast %cst_9 : f32 to vector<8x1024xf32>
    %18 = arith.maximumf %16, %17 : vector<8x1024xf32>
    %19 = arith.truncf %18 : vector<8x1024xf32> to vector<8x1024xbf16>
    %c0_10 = arith.constant 0 : index
    %c0_11 = arith.constant 0 : index
    %20 = vector.load %arg5[%c0_10, %c0_11] : memref<1024x128xbf16, #tpu.memory_space<vmem>>, vector<1024x128xbf16>
    %cst_12 = arith.constant dense<0.000000e+00> : vector<8x128xf32>
    %21 = tpu.matmul %19, %20, %cst_12 {dimension_numbers = #tpu.dot_dimension_numbers<[1], [0], [0], [1], [0, 0, 1, 1], [], []>} : vector<8x1024xbf16>, vector<1024x128xbf16>, vector<8x128xf32> -> vector<8x128xf32>
    %c0_13 = arith.constant 0 : index
    %c0_14 = arith.constant 0 : index
    %22 = vector.load %arg6[%c0_13, %c0_14] : memref<1x128xf32, #tpu.memory_space<vmem>>, vector<1x128xf32>
    %23 = vector.broadcast %22 : vector<1x128xf32> to vector<8x128xf32>
    %24 = arith.addf %21, %23 : vector<8x128xf32>
    %cst_15 = arith.constant 0.000000e+00 : f32
    %25 = vector.broadcast %cst_15 : f32 to vector<8x128xf32>
    %26 = arith.maximumf %24, %25 : vector<8x128xf32>
    %c0_16 = arith.constant 0 : index
    %c0_17 = arith.constant 0 : index
    %27 = vector.load %arg7[%c0_16, %c0_17] : memref<1x128xf32, #tpu.memory_space<vmem>>, vector<1x128xf32>
    %28 = vector.broadcast %27 : vector<1x128xf32> to vector<8x128xf32>
    %29 = arith.mulf %26, %28 : vector<8x128xf32>
    %cst_18 = arith.constant dense<0.000000e+00> : vector<8xf32>
    %30 = vector.multi_reduction <add>, %29, %cst_18 [1] : vector<8x128xf32> to vector<8xf32>
    %31 = vector.shape_cast %30 : vector<8xf32> to vector<8x1xf32>
    %c0_19 = arith.constant 0 : index
    %c0_20 = arith.constant 0 : index
    %32 = vector.load %arg8[%c0_19, %c0_20] : memref<1x1xf32, #tpu.memory_space<vmem>>, vector<1x1xf32>
    %33 = vector.broadcast %32 : vector<1x1xf32> to vector<8x1xf32>
    %34 = arith.addf %31, %33 : vector<8x1xf32>
    %35 = arith.negf %34 : vector<8x1xf32>
    %36 = math.exp %35 : vector<8x1xf32>
    %cst_21 = arith.constant 1.000000e+00 : f32
    %37 = vector.broadcast %cst_21 : f32 to vector<8x1xf32>
    %38 = arith.addf %37, %36 : vector<8x1xf32>
    %39 = arith.divf %37, %38 : vector<8x1xf32>
    %40 = vector.shape_cast %39 : vector<8x1xf32> to vector<8x1xf32>
    %41 = vector.broadcast %40 : vector<8x1xf32> to vector<8x128xf32>
    %c0_22 = arith.constant 0 : index
    %c0_23 = arith.constant 0 : index
    %42 = vector.load %arg9[%c0_22, %c0_23] : memref<8x128xf32, #tpu.memory_space<vmem>>, vector<8x128xf32>
    tpu.vector_store %arg9[%c0_22, %c0_23], %41 {strides = array<i32>} : memref<8x128xf32, #tpu.memory_space<vmem>>, vector<8x128xf32>,
    return
  }
  func.func @transform_0(%arg0: i32) -> (i32, i32) {
    %c0_i32 = arith.constant 0 : i32
    %c0_i32_0 = arith.constant 0 : i32
    return %arg0, %c0_i32 : i32, i32
  }
  func.func @transform_1(%arg0: i32) -> (i32, i32) {
    %c0_i32 = arith.constant 0 : i32
    %c0_i32_0 = arith.constant 0 : i32
    %c0_i32_1 = arith.constant 0 : i32
    return %c0_i32, %c0_i32_0 : i32, i32
  }
  func.func @transform_2(%arg0: i32) -> (i32, i32) {
    %c0_i32 = arith.constant 0 : i32
    %c0_i32_0 = arith.constant 0 : i32
    %c0_i32_1 = arith.constant 0 : i32
    return %c0_i32, %c0_i32_0 : i32, i32
  }
  func.func @transform_3(%arg0: i32) -> (i32, i32) {
    %c0_i32 = arith.constant 0 : i32
    %c0_i32_0 = arith.constant 0 : i32
    %c0_i32_1 = arith.constant 0 : i32
    return %c0_i32, %c0_i32_0 : i32, i32
  }
  func.func @transform_4(%arg0: i32) -> (i32, i32) {
    %c0_i32 = arith.constant 0 : i32
    %c0_i32_0 = arith.constant 0 : i32
    %c0_i32_1 = arith.constant 0 : i32
    return %c0_i32, %c0_i32_0 : i32, i32
  }
  func.func @transform_5(%arg0: i32) -> (i32, i32) {
    %c0_i32 = arith.constant 0 : i32
    %c0_i32_0 = arith.constant 0 : i32
    %c0_i32_1 = arith.constant 0 : i32
    return %c0_i32, %c0_i32_0 : i32, i32
  }
  func.func @transform_6(%arg0: i32) -> (i32, i32) {
    %c0_i32 = arith.constant 0 : i32
    %c0_i32_0 = arith.constant 0 : i32
    %c0_i32_1 = arith.constant 0 : i32
    return %c0_i32, %c0_i32_0 : i32, i32
  }
  func.func @transform_7(%arg0: i32) -> (i32, i32) {
    %c0_i32 = arith.constant 0 : i32
    %c0_i32_0 = arith.constant 0 : i32
    %c0_i32_1 = arith.constant 0 : i32
    return %c0_i32, %c0_i32_0 : i32, i32
  }
  func.func @transform_8(%arg0: i32) -> (i32, i32) {
    %c0_i32 = arith.constant 0 : i32
    %c0_i32_0 = arith.constant 0 : i32
    return %arg0, %c0_i32 : i32, i32
  }
}

</mosaic_0001>

<llo_original>
// kernel: tpu_custom_call.1
$region0: #{tpu_custom_call.1}
  #allocation0 [shape = 'u32[]', space=smem, size = 0x4, offset = 0x4, fixed_abs, tag = 'smem constant byte address 0x4 - core index']
  #allocation1 [shape = 'u32[144,128]{1,0:T(1,128)}', space=vmem, size = 0x12000, scoped, tag = 'internal scratch']
  #allocation2 [shape = 'f32[1,1]{1,0:T(1,128)S(1)}', space=vmem, size = 0x200, scoped, tag = 'scoped memory for tpu_custom_call.1']
  %s0 = inlined_call_operand.hbm [shape: f32[8,16], index: 0, kind: input, shape index: {}]
  %s1 = inlined_call_operand.hbm [shape: bf16[16,1024], index: 1, kind: input, shape index: {}]
  %s2 = inlined_call_operand.hbm [shape: bf16[16,1024], index: 2, kind: input, shape index: {}]
  %s3 = inlined_call_operand.vmem [shape: f32[1,1024], index: 3, kind: input, shape index: {}]
  %s4 = inlined_call_operand.hbm [shape: bf16[1024,128], index: 4, kind: input, shape index: {}]
  %s5 = inlined_call_operand.vmem [shape: f32[1,128], index: 5, kind: input, shape index: {}]
  %s6 = inlined_call_operand.vmem [shape: f32[1,128], index: 6, kind: input, shape index: {}]
  %s7 = inlined_call_operand.<no memory space> [shape: f32[1,1], index: 7, kind: input, shape index: {}]
  %s8 = inlined_call_operand.hbm [shape: f32[8,128], index: 8, kind: output, shape index: {}]
  %s9 = sld [smem:[#allocation0]]
  $region58: #{tpu_custom_call.1} parent=0
    _
  %s11 = ssub.s32 1, %s9
  %s12 = scalar_select 0, %s11, %s9
  %v13 = vstv %s7
  %14 = vst [vmem:[#allocation2] sm:$0x1] %v13
  $region1: #{tpu_custom_call.1} parent=0
    #allocation3 [shape = 'u8[4096]{0}', space=vmem, size = 0x1000, scoped, tag = 'input window, operand 0, single buffered']
    #allocation4 [shape = 's32[1]{0}', space=sflag, size = 0x4, scoped, tag = 'scoped memory for tpu_custom_call.1']
    #allocation5 [shape = 's32[1]{0}', space=sflag, size = 0x4, scoped, tag = 'scoped memory for tpu_custom_call.1']
    #allocation6 [shape = 'u8[32768]{0}', space=vmem, size = 0x8000, scoped, tag = 'input window, operand 1, single buffered']
    #allocation7 [shape = 's32[1]{0}', space=sflag, size = 0x4, scoped, tag = 'scoped memory for tpu_custom_call.1']
    #allocation8 [shape = 'u8[32768]{0}', space=vmem, size = 0x8000, scoped, tag = 'input window, operand 2, single buffered']
    #allocation9 [shape = 'u8[262144]{0}', space=vmem, size = 0x40000, scoped, tag = 'input window, operand 4, single buffered']
    #allocation10 [shape = 's32[1]{0}', space=sflag, size = 0x4, scoped, tag = 'scoped memory for tpu_custom_call.1']
    #allocation11 [shape = 'u8[4096]{0}', space=vmem, size = 0x1000, scoped, tag = 'output window, operand 0, single buffered']
    %15 = vsyncpa [#allocation4], 0
    %16 = vsyncpa [#allocation7], 0
    %17 = vsyncpa [#allocation10], 0
    %18 = vsyncpa [#allocation5], 0
    // Predicated region
    $region2: #{tpu_custom_call.1} parent=1 // pred_check
      _
    $region3: #{tpu_custom_call.1} parent=1 // pred_check_branch
      %20 = sbr.rel (0) target = $region5
    $region4: #{tpu_custom_call.1} parent=1 // pred_region
      %s22 = ssub.s32 128, 128
      %23 = vsyncadd [#allocation4], %s22
      %s25 = sshll.u32 [#allocation3], 4
      %s26 = int_to_ptr.vmem [resolvable:$true] %s25
      %28 = dma.hbm_to_vmem [thread:$0]  %s0, 128, %s26, [#allocation4]
    $region5: #{tpu_custom_call.1} parent=1 // pred_fallthru
      _
    // Predicated region
    $region6: #{tpu_custom_call.1} parent=1 // pred_check
      _
    $region7: #{tpu_custom_call.1} parent=1 // pred_check_branch
      %30 = sbr.rel (0) target = $region9
    $region8: #{tpu_custom_call.1} parent=1 // pred_region
      %s32 = ssub.s32 1024, 1024
      %33 = vsyncadd [#allocation7], %s32
      %s34 = sshll.u32 [#allocation6], 4
      %s35 = int_to_ptr.vmem [resolvable:$true] %s34
      %40 = dma.hbm_to_vmem [thread:$0]  %s1, 1024, %s35, [#allocation7], 512, 512, 32
    $region9: #{tpu_custom_call.1} parent=1 // pred_fallthru
      _
    // Predicated region
    $region10: #{tpu_custom_call.1} parent=1 // pred_check
      _
    $region11: #{tpu_custom_call.1} parent=1 // pred_check_branch
      %42 = sbr.rel (0) target = $region13
    $region12: #{tpu_custom_call.1} parent=1 // pred_region
      %s44 = ssub.s32 1024, 1024
      %45 = vsyncadd [#allocation7], %s44
      %s46 = sshll.u32 [#allocation8], 4
      %s47 = int_to_ptr.vmem [resolvable:$true] %s46
      %52 = dma.hbm_to_vmem [thread:$0]  %s2, 1024, %s47, [#allocation7], 512, 512, 32
    $region13: #{tpu_custom_call.1} parent=1 // pred_fallthru
      _
    // Predicated region
    $region14: #{tpu_custom_call.1} parent=1 // pred_check
      _
    $region15: #{tpu_custom_call.1} parent=1 // pred_check_branch
      %54 = sbr.rel (0) target = $region17
    $region16: #{tpu_custom_call.1} parent=1 // pred_region
      _
    $region17: #{tpu_custom_call.1} parent=1 // pred_fallthru
      _
    // Predicated region
    $region18: #{tpu_custom_call.1} parent=1 // pred_check
      _
    $region19: #{tpu_custom_call.1} parent=1 // pred_check_branch
      %56 = sbr.rel (0) target = $region21
    $region20: #{tpu_custom_call.1} parent=1 // pred_region
      %s58 = ssub.s32 8192, 8192
      %59 = vsyncadd [#allocation10], %s58
      %s60 = sshll.u32 [#allocation9], 4
      %s61 = int_to_ptr.vmem [resolvable:$true] %s60
      %66 = dma.hbm_to_vmem [thread:$0]  %s4, 8192, %s61, [#allocation10], 64, 64, 4
    $region21: #{tpu_custom_call.1} parent=1 // pred_fallthru
      _
    // Predicated region
    $region22: #{tpu_custom_call.1} parent=1 // pred_check
      _
    $region23: #{tpu_custom_call.1} parent=1 // pred_check_branch
      %68 = sbr.rel (0) target = $region25
    $region24: #{tpu_custom_call.1} parent=1 // pred_region
      _
    $region25: #{tpu_custom_call.1} parent=1 // pred_fallthru
      _
    // Predicated region
    $region26: #{tpu_custom_call.1} parent=1 // pred_check
      _
    $region27: #{tpu_custom_call.1} parent=1 // pred_check_branch
      %70 = sbr.rel (0) target = $region29
    $region28: #{tpu_custom_call.1} parent=1 // pred_region
      _
    $region29: #{tpu_custom_call.1} parent=1 // pred_fallthru
      _
    // Predicated region
    $region30: #{tpu_custom_call.1} parent=1 // pred_check
      _
    $region31: #{tpu_custom_call.1} parent=1 // pred_check_branch
      %72 = sbr.rel (0) target = $region33
    $region32: #{tpu_custom_call.1} parent=1 // pred_region
      _
    $region33: #{tpu_custom_call.1} parent=1 // pred_fallthru
      _
    // Predicated region
    $region34: #{tpu_custom_call.1} parent=1 // pred_check
      _
    $region35: #{tpu_custom_call.1} parent=1 // pred_check_branch
      %74 = sbr.rel (0) target = $region37
    $region36: #{tpu_custom_call.1} parent=1 // pred_region
      %75 = dma.done [#allocation4], 128
    $region37: #{tpu_custom_call.1} parent=1 // pred_fallthru
      _
    // Predicated region
    $region38: #{tpu_custom_call.1} parent=1 // pred_check
      _
    $region39: #{tpu_custom_call.1} parent=1 // pred_check_branch
      %77 = sbr.rel (0) target = $region41
    $region40: #{tpu_custom_call.1} parent=1 // pred_region
      %78 = dma.done [#allocation7], 1024
    $region41: #{tpu_custom_call.1} parent=1 // pred_fallthru
      _
    // Predicated region
    $region42: #{tpu_custom_call.1} parent=1 // pred_check
      _
    $region43: #{tpu_custom_call.1} parent=1 // pred_check_branch
      %80 = sbr.rel (0) target = $region45
    $region44: #{tpu_custom_call.1} parent=1 // pred_region
      %81 = dma.done [#allocation7], 1024
    $region45: #{tpu_custom_call.1} parent=1 // pred_fallthru
      _
    // Predicated region
    $region46: #{tpu_custom_call.1} parent=1 // pred_check
      _
    $region47: #{tpu_custom_call.1} parent=1 // pred_check_branch
      %83 = sbr.rel (0) target = $region49
    $region48: #{tpu_custom_call.1} parent=1 // pred_region
      %84 = dma.done [#allocation10], 8192
    $region49: #{tpu_custom_call.1} parent=1 // pred_fallthru
      _
    %v86 = vld [vmem:[#allocation3] sm:$0xff]
    %v87 = vxor.u32 %v86, 2147483648
    %v88 = vmul.f32 %v87, 1.442695
    %v89 = vpow.pop %v88
    %v90 = vadd.f32 %v89, 1.0
    %v91 = vrcp.pop %v90
    %v92 = vmul.f32 1.0, %v91
    %v93 = vrsqrt.pop %v92
    %v94 = vmul.f32 %v92, %v93
    %vm95 = vcmp.eq.f32.partialorder %v92, inf
    %v96 = vsel %vm95, %v92, %v94
    %vm97 = vcmp.eq.f32.partialorder %v92, 0.0
    %v98 = vand.u32 %v92, 2147483648
    %v99 = vsel %vm97, %v98, %v96
    %v100 = vpack.c.bf16 %v99, %v99
    %v101 = vld [vmem:[#allocation6] sm:$0xff]
    %v102 = vld [vmem:[#allocation6 + $0x8] sm:$0xff]
    %v103 = vld [vmem:[#allocation6 + $0x10] sm:$0xff]
    %v104 = vld [vmem:[#allocation6 + $0x18] sm:$0xff]
    %v105 = vld [vmem:[#allocation6 + $0x20] sm:$0xff]
    %v106 = vld [vmem:[#allocation6 + $0x28] sm:$0xff]
    %v107 = vld [vmem:[#allocation6 + $0x30] sm:$0xff]
    %v108 = vld [vmem:[#allocation6 + $0x38] sm:$0xff]
    %v109 = vpack.c.bf16 %v92, %v92
    %v110 = vld [vmem:[#allocation8] sm:$0xff]
    %v111 = vld [vmem:[#allocation8 + $0x8] sm:$0xff]
    %v112 = vld [vmem:[#allocation8 + $0x10] sm:$0xff]
    %v113 = vld [vmem:[#allocation8 + $0x18] sm:$0xff]
    %v114 = vld [vmem:[#allocation8 + $0x20] sm:$0xff]
    %v115 = vld [vmem:[#allocation8 + $0x28] sm:$0xff]
    %v116 = vld [vmem:[#allocation8 + $0x30] sm:$0xff]
    %v117 = vld [vmem:[#allocation8 + $0x38] sm:$0xff]
    %v126 = vunpack.c.l.b16 %v110
    %v127 = vunpack.c.h.b16 %v110
    %v128 = vunpack.c.l.b16 %v111
    %v129 = vunpack.c.h.b16 %v111
    %v130 = vunpack.c.l.b16 %v112
    %v131 = vunpack.c.h.b16 %v112
    %v132 = vunpack.c.l.b16 %v113
    %v133 = vunpack.c.h.b16 %v113
    %v134 = vunpack.c.l.b16 %v114
    %v135 = vunpack.c.h.b16 %v114
    %v136 = vunpack.c.l.b16 %v115
    %v137 = vunpack.c.h.b16 %v115
    %v138 = vunpack.c.l.b16 %v116
    %v139 = vunpack.c.h.b16 %v116
    %v140 = vunpack.c.l.b16 %v117
    %v141 = vunpack.c.h.b16 %v117
    %v142 = vpack.c.b16 %v134, %v126
    %v143 = vpack.c.b16 %v135, %v127
    %v144 = vpack.c.b16 %v136, %v128
    %v145 = vpack.c.b16 %v137, %v129
    %v146 = vpack.c.b16 %v138, %v130
    %v147 = vpack.c.b16 %v139, %v131
    %v148 = vpack.c.b16 %v140, %v132
    %v149 = vpack.c.b16 %v141, %v133
    %vm158 = vcmask 130048
    %v160 = vsel %vm158, %v109, 0
    %162 = vmatprep.subr.bf16.mxu0 %v143
    %163 = vmatpush1.bf16.msra.mxu0 %v142
    %164 = vmatprep.subr.bf16.mxu0 0
    %165 = vmatpush1.bf16.msra.mxu0 0
    %166 = vmatprep.subr.bf16.mxu0 0
    %167 = vmatpush1.bf16.msra.mxu0 0
    %168 = vmatprep.subr.bf16.mxu0 0
    %169 = vmatpush1.bf16.msra.mxu0 0
    %170 = vmatprep.subr.bf16.mxu0 0
    %171 = vmatpush1.bf16.msra.mxu0 0
    %172 = vmatprep.subr.bf16.mxu0 0
    %173 = vmatpush1.bf16.msra.mxu0 0
    %174 = vmatprep.subr.bf16.mxu0 0
    %175 = vmatpush1.bf16.msra.mxu0 0
    %176 = vmatprep.subr.bf16.mxu0 0
    %177 = vmatpush1.bf16.msra.mxu0 0
    %178 = vmatprep.subr.bf16.mxu0 0
    %179 = vmatpush1.bf16.msra.mxu0 0
    %180 = vmatprep.subr.bf16.mxu0 0
    %181 = vmatpush1.bf16.msra.mxu0 0
    %182 = vmatprep.subr.bf16.mxu0 0
    %183 = vmatpush1.bf16.msra.mxu0 0
    %184 = vmatprep.subr.bf16.mxu0 0
    %185 = vmatpush1.bf16.msra.mxu0 0
    %186 = vmatprep.subr.bf16.mxu0 0
    %187 = vmatpush1.bf16.msra.mxu0 0
    %188 = vmatprep.subr.bf16.mxu0 0
    %189 = vmatpush1.bf16.msra.mxu0 0
    %190 = vmatprep.subr.bf16.mxu0 0
    %191 = vmatpush1.bf16.msra.mxu0 0
    %192 = vmatprep.subr.bf16.mxu0 0
    %193 = vmatpush1.bf16.msra.mxu0 0
    %194 = vmatprep.mubr.bf16.mxu0 0
    %195 = vmatmul.mubr.bf16.gmra.mrb[0].mxu0 %v160
    %v196 = vpop.f32.mrb[0].mxu0
    %v197 = vadd.f32 0.0, %v196
    %v198 = vpop.f32.mrb[0].mxu0
    %v199 = vadd.f32 0.0, %v198
    %v200 = vpop.f32.mrb[0].mxu0
    %v201 = vpop.f32.mrb[0].mxu0
    %202 = vdwg.mxu0
    %203 = vmatprep.subr.bf16.mxu0 %v145
    %204 = vmatpush1.bf16.msra.mxu0 %v144
    %205 = vmatprep.subr.bf16.mxu0 0
    %206 = vmatpush1.bf16.msra.mxu0 0
    %207 = vmatprep.subr.bf16.mxu0 0
    %208 = vmatpush1.bf16.msra.mxu0 0
    %209 = vmatprep.subr.bf16.mxu0 0
    %210 = vmatpush1.bf16.msra.mxu0 0
    %211 = vmatprep.subr.bf16.mxu0 0
    %212 = vmatpush1.bf16.msra.mxu0 0
    %213 = vmatprep.subr.bf16.mxu0 0
    %214 = vmatpush1.bf16.msra.mxu0 0
    %215 = vmatprep.subr.bf16.mxu0 0
    %216 = vmatpush1.bf16.msra.mxu0 0
    %217 = vmatprep.subr.bf16.mxu0 0
    %218 = vmatpush1.bf16.msra.mxu0 0
    %219 = vmatprep.subr.bf16.mxu0 0
    %220 = vmatpush1.bf16.msra.mxu0 0
    %221 = vmatprep.subr.bf16.mxu0 0
    %222 = vmatpush1.bf16.msra.mxu0 0
    %223 = vmatprep.subr.bf16.mxu0 0
    %224 = vmatpush1.bf16.msra.mxu0 0
    %225 = vmatprep.subr.bf16.mxu0 0
    %226 = vmatpush1.bf16.msra.mxu0 0
    %227 = vmatprep.subr.bf16.mxu0 0
    %228 = vmatpush1.bf16.msra.mxu0 0
    %229 = vmatprep.subr.bf16.mxu0 0
    %230 = vmatpush1.bf16.msra.mxu0 0
    %231 = vmatprep.subr.bf16.mxu0 0
    %232 = vmatpush1.bf16.msra.mxu0 0
    %233 = vmatprep.subr.bf16.mxu0 0
    %234 = vmatpush1.bf16.msra.mxu0 0
    %235 = vmatprep.mubr.bf16.mxu0 0
    %236 = vmatmul.mubr.bf16.gmra.mrb[0].mxu0 %v160
    %v237 = vpop.f32.mrb[0].mxu0
    %v238 = vadd.f32 0.0, %v237
    %v239 = vpop.f32.mrb[0].mxu0
    %v240 = vadd.f32 0.0, %v239
    %v241 = vpop.f32.mrb[0].mxu0
    %v242 = vpop.f32.mrb[0].mxu0
    %243 = vdwg.mxu0
    %244 = vmatprep.subr.bf16.mxu0 %v147
    %245 = vmatpush1.bf16.msra.mxu0 %v146
    %246 = vmatprep.subr.bf16.mxu0 0
    %247 = vmatpush1.bf16.msra.mxu0 0
    %248 = vmatprep.subr.bf16.mxu0 0
    %249 = vmatpush1.bf16.msra.mxu0 0
    %250 = vmatprep.subr.bf16.mxu0 0
    %251 = vmatpush1.bf16.msra.mxu0 0
    %252 = vmatprep.subr.bf16.mxu0 0
    %253 = vmatpush1.bf16.msra.mxu0 0
    %254 = vmatprep.subr.bf16.mxu0 0
    %255 = vmatpush1.bf16.msra.mxu0 0
    %256 = vmatprep.subr.bf16.mxu0 0
    %257 = vmatpush1.bf16.msra.mxu0 0
    %258 = vmatprep.subr.bf16.mxu0 0
    %259 = vmatpush1.bf16.msra.mxu0 0
    %260 = vmatprep.subr.bf16.mxu0 0
    %261 = vmatpush1.bf16.msra.mxu0 0
    %262 = vmatprep.subr.bf16.mxu0 0
    %263 = vmatpush1.bf16.msra.mxu0 0
    %264 = vmatprep.subr.bf16.mxu0 0
    %265 = vmatpush1.bf16.msra.mxu0 0
    %266 = vmatprep.subr.bf16.mxu0 0
    %267 = vmatpush1.bf16.msra.mxu0 0
    %268 = vmatprep.subr.bf16.mxu0 0
    %269 = vmatpush1.bf16.msra.mxu0 0
    %270 = vmatprep.subr.bf16.mxu0 0
    %271 = vmatpush1.bf16.msra.mxu0 0
    %272 = vmatprep.subr.bf16.mxu0 0
    %273 = vmatpush1.bf16.msra.mxu0 0
    %274 = vmatprep.subr.bf16.mxu0 0
    %275 = vmatpush1.bf16.msra.mxu0 0
    %276 = vmatprep.mubr.bf16.mxu0 0
    %277 = vmatmul.mubr.bf16.gmra.mrb[0].mxu0 %v160
    %v278 = vpop.f32.mrb[0].mxu0
    %v279 = vadd.f32 0.0, %v278
    %v280 = vpop.f32.mrb[0].mxu0
    %v281 = vadd.f32 0.0, %v280
    %v282 = vpop.f32.mrb[0].mxu0
    %v283 = vpop.f32.mrb[0].mxu0
    %284 = vdwg.mxu0
    %285 = vmatprep.subr.bf16.mxu0 %v149
    %286 = vmatpush1.bf16.msra.mxu0 %v148
    %287 = vmatprep.subr.bf16.mxu0 0
    %288 = vmatpush1.bf16.msra.mxu0 0
    %289 = vmatprep.subr.bf16.mxu0 0
    %290 = vmatpush1.bf16.msra.mxu0 0
    %291 = vmatprep.subr.bf16.mxu0 0
    %292 = vmatpush1.bf16.msra.mxu0 0
    %293 = vmatprep.subr.bf16.mxu0 0
    %294 = vmatpush1.bf16.msra.mxu0 0
    %295 = vmatprep.subr.bf16.mxu0 0
    %296 = vmatpush1.bf16.msra.mxu0 0
    %297 = vmatprep.subr.bf16.mxu0 0
    %298 = vmatpush1.bf16.msra.mxu0 0
    %299 = vmatprep.subr.bf16.mxu0 0
    %300 = vmatpush1.bf16.msra.mxu0 0
    %301 = vmatprep.subr.bf16.mxu0 0
    %302 = vmatpush1.bf16.msra.mxu0 0
    %303 = vmatprep.subr.bf16.mxu0 0
    %304 = vmatpush1.bf16.msra.mxu0 0
    %305 = vmatprep.subr.bf16.mxu0 0
    %306 = vmatpush1.bf16.msra.mxu0 0
    %307 = vmatprep.subr.bf16.mxu0 0
    %308 = vmatpush1.bf16.msra.mxu0 0
    %309 = vmatprep.subr.bf16.mxu0 0
    %310 = vmatpush1.bf16.msra.mxu0 0
    %311 = vmatprep.subr.bf16.mxu0 0
    %312 = vmatpush1.bf16.msra.mxu0 0
    %313 = vmatprep.subr.bf16.mxu0 0
    %314 = vmatpush1.bf16.msra.mxu0 0
    %315 = vmatprep.subr.bf16.mxu0 0
    %316 = vmatpush1.bf16.msra.mxu0 0
    %317 = vmatprep.mubr.bf16.mxu0 0
    %318 = vmatmul.mubr.bf16.gmra.mrb[0].mxu0 %v160
    %v319 = vpop.f32.mrb[0].mxu0
    %v320 = vadd.f32 0.0, %v319
    %v321 = vpop.f32.mrb[0].mxu0
    %v322 = vadd.f32 0.0, %v321
    %v323 = vpop.f32.mrb[0].mxu0
    %v324 = vpop.f32.mrb[0].mxu0
    %325 = vdwg.mxu0
    %v334 = vunpack.c.l.b16 %v101
    %v335 = vunpack.c.h.b16 %v101
    %v336 = vunpack.c.l.b16 %v102
    %v337 = vunpack.c.h.b16 %v102
    %v338 = vunpack.c.l.b16 %v103
    %v339 = vunpack.c.h.b16 %v103
    %v340 = vunpack.c.l.b16 %v104
    %v341 = vunpack.c.h.b16 %v104
    %v342 = vunpack.c.l.b16 %v105
    %v343 = vunpack.c.h.b16 %v105
    %v344 = vunpack.c.l.b16 %v106
    %v345 = vunpack.c.h.b16 %v106
    %v346 = vunpack.c.l.b16 %v107
    %v347 = vunpack.c.h.b16 %v107
    %v348 = vunpack.c.l.b16 %v108
    %v349 = vunpack.c.h.b16 %v108
    %v350 = vpack.c.b16 %v342, %v334
    %v351 = vpack.c.b16 %v343, %v335
    %v352 = vpack.c.b16 %v344, %v336
    %v353 = vpack.c.b16 %v345, %v337
    %v354 = vpack.c.b16 %v346, %v338
    %v355 = vpack.c.b16 %v347, %v339
    %v356 = vpack.c.b16 %v348, %v340
    %v357 = vpack.c.b16 %v349, %v341
    %v367 = vsel %vm158, %v100, 0
    %369 = vmatprep.subr.bf16.mxu0 %v351
    %370 = vmatpush1.bf16.msra.mxu0 %v350
    %371 = vmatprep.subr.bf16.mxu0 0
    %372 = vmatpush1.bf16.msra.mxu0 0
    %373 = vmatprep.subr.bf16.mxu0 0
    %374 = vmatpush1.bf16.msra.mxu0 0
    %375 = vmatprep.subr.bf16.mxu0 0
    %376 = vmatpush1.bf16.msra.mxu0 0
    %377 = vmatprep.subr.bf16.mxu0 0
    %378 = vmatpush1.bf16.msra.mxu0 0
    %379 = vmatprep.subr.bf16.mxu0 0
    %380 = vmatpush1.bf16.msra.mxu0 0
    %381 = vmatprep.subr.bf16.mxu0 0
    %382 = vmatpush1.bf16.msra.mxu0 0
    %383 = vmatprep.subr.bf16.mxu0 0
    %384 = vmatpush1.bf16.msra.mxu0 0
    %385 = vmatprep.subr.bf16.mxu0 0
    %386 = vmatpush1.bf16.msra.mxu0 0
    %387 = vmatprep.subr.bf16.mxu0 0
    %388 = vmatpush1.bf16.msra.mxu0 0
    %389 = vmatprep.subr.bf16.mxu0 0
    %390 = vmatpush1.bf16.msra.mxu0 0
    %391 = vmatprep.subr.bf16.mxu0 0
    %392 = vmatpush1.bf16.msra.mxu0 0
    %393 = vmatprep.subr.bf16.mxu0 0
    %394 = vmatpush1.bf16.msra.mxu0 0
    %395 = vmatprep.subr.bf16.mxu0 0
    %396 = vmatpush1.bf16.msra.mxu0 0
    %397 = vmatprep.subr.bf16.mxu0 0
    %398 = vmatpush1.bf16.msra.mxu0 0
    %399 = vmatprep.subr.bf16.mxu0 0
    %400 = vmatpush1.bf16.msra.mxu0 0
    %401 = vmatprep.mubr.bf16.mxu0 0
    %402 = vmatmul.mubr.bf16.gmra.mrb[0].mxu0 %v367
    %v403 = vpop.f32.mrb[0].mxu0
    %v404 = vadd.f32 %v197, %v403
    %v405 = vpop.f32.mrb[0].mxu0
    %v406 = vadd.f32 %v199, %v405
    %v407 = vpop.f32.mrb[0].mxu0
    %v408 = vpop.f32.mrb[0].mxu0
    %409 = vdwg.mxu0
    %410 = vmatprep.subr.bf16.mxu0 %v353
    %411 = vmatpush1.bf16.msra.mxu0 %v352
    %412 = vmatprep.subr.bf16.mxu0 0
    %413 = vmatpush1.bf16.msra.mxu0 0
    %414 = vmatprep.subr.bf16.mxu0 0
    %415 = vmatpush1.bf16.msra.mxu0 0
    %416 = vmatprep.subr.bf16.mxu0 0
    %417 = vmatpush1.bf16.msra.mxu0 0
    %418 = vmatprep.subr.bf16.mxu0 0
    %419 = vmatpush1.bf16.msra.mxu0 0
    %420 = vmatprep.subr.bf16.mxu0 0
    %421 = vmatpush1.bf16.msra.mxu0 0
    %422 = vmatprep.subr.bf16.mxu0 0
    %423 = vmatpush1.bf16.msra.mxu0 0
    %424 = vmatprep.subr.bf16.mxu0 0
    %425 = vmatpush1.bf16.msra.mxu0 0
    %426 = vmatprep.subr.bf16.mxu0 0
    %427 = vmatpush1.bf16.msra.mxu0 0
    %428 = vmatprep.subr.bf16.mxu0 0
    %429 = vmatpush1.bf16.msra.mxu0 0
    %430 = vmatprep.subr.bf16.mxu0 0
    %431 = vmatpush1.bf16.msra.mxu0 0
    %432 = vmatprep.subr.bf16.mxu0 0
    %433 = vmatpush1.bf16.msra.mxu0 0
    %434 = vmatprep.subr.bf16.mxu0 0
    %435 = vmatpush1.bf16.msra.mxu0 0
    %436 = vmatprep.subr.bf16.mxu0 0
    %437 = vmatpush1.bf16.msra.mxu0 0
    %438 = vmatprep.subr.bf16.mxu0 0
    %439 = vmatpush1.bf16.msra.mxu0 0
    %440 = vmatprep.subr.bf16.mxu0 0
    %441 = vmatpush1.bf16.msra.mxu0 0
    %442 = vmatprep.mubr.bf16.mxu0 0
    %443 = vmatmul.mubr.bf16.gmra.mrb[0].mxu0 %v367
    %v444 = vpop.f32.mrb[0].mxu0
    %v445 = vadd.f32 %v238, %v444
    %v446 = vpop.f32.mrb[0].mxu0
    %v447 = vadd.f32 %v240, %v446
    %v448 = vpop.f32.mrb[0].mxu0
    %v449 = vpop.f32.mrb[0].mxu0
    %450 = vdwg.mxu0
    %451 = vmatprep.subr.bf16.mxu0 %v355
    %452 = vmatpush1.bf16.msra.mxu0 %v354
    %453 = vmatprep.subr.bf16.mxu0 0
    %454 = vmatpush1.bf16.msra.mxu0 0
    %455 = vmatprep.subr.bf16.mxu0 0
    %456 = vmatpush1.bf16.msra.mxu0 0
    %457 = vmatprep.subr.bf16.mxu0 0
    %458 = vmatpush1.bf16.msra.mxu0 0
    %459 = vmatprep.subr.bf16.mxu0 0
    %460 = vmatpush1.bf16.msra.mxu0 0
    %461 = vmatprep.subr.bf16.mxu0 0
    %462 = vmatpush1.bf16.msra.mxu0 0
    %463 = vmatprep.subr.bf16.mxu0 0
    %464 = vmatpush1.bf16.msra.mxu0 0
    %465 = vmatprep.subr.bf16.mxu0 0
    %466 = vmatpush1.bf16.msra.mxu0 0
    %467 = vmatprep.subr.bf16.mxu0 0
    %468 = vmatpush1.bf16.msra.mxu0 0
    %469 = vmatprep.subr.bf16.mxu0 0
    %470 = vmatpush1.bf16.msra.mxu0 0
    %471 = vmatprep.subr.bf16.mxu0 0
    %472 = vmatpush1.bf16.msra.mxu0 0
    %473 = vmatprep.subr.bf16.mxu0 0
    %474 = vmatpush1.bf16.msra.mxu0 0
    %475 = vmatprep.subr.bf16.mxu0 0
    %476 = vmatpush1.bf16.msra.mxu0 0
    %477 = vmatprep.subr.bf16.mxu0 0
    %478 = vmatpush1.bf16.msra.mxu0 0
    %479 = vmatprep.subr.bf16.mxu0 0
    %480 = vmatpush1.bf16.msra.mxu0 0
    %481 = vmatprep.subr.bf16.mxu0 0
    %482 = vmatpush1.bf16.msra.mxu0 0
    %483 = vmatprep.mubr.bf16.mxu0 0
    %484 = vmatmul.mubr.bf16.gmra.mrb[0].mxu0 %v367
    %v485 = vpop.f32.mrb[0].mxu0
    %v486 = vadd.f32 %v279, %v485
    %v487 = vpop.f32.mrb[0].mxu0
    %v488 = vadd.f32 %v281, %v487
    %v489 = vpop.f32.mrb[0].mxu0
    %v490 = vpop.f32.mrb[0].mxu0
    %491 = vdwg.mxu0
    %492 = vmatprep.subr.bf16.mxu0 %v357
    %493 = vmatpush1.bf16.msra.mxu0 %v356
    %494 = vmatprep.subr.bf16.mxu0 0
    %495 = vmatpush1.bf16.msra.mxu0 0
    %496 = vmatprep.subr.bf16.mxu0 0
    %497 = vmatpush1.bf16.msra.mxu0 0
    %498 = vmatprep.subr.bf16.mxu0 0
    %499 = vmatpush1.bf16.msra.mxu0 0
    %500 = vmatprep.subr.bf16.mxu0 0
    %501 = vmatpush1.bf16.msra.mxu0 0
    %502 = vmatprep.subr.bf16.mxu0 0
    %503 = vmatpush1.bf16.msra.mxu0 0
    %504 = vmatprep.subr.bf16.mxu0 0
    %505 = vmatpush1.bf16.msra.mxu0 0
    %506 = vmatprep.subr.bf16.mxu0 0
    %507 = vmatpush1.bf16.msra.mxu0 0
    %508 = vmatprep.subr.bf16.mxu0 0
    %509 = vmatpush1.bf16.msra.mxu0 0
    %510 = vmatprep.subr.bf16.mxu0 0
    %511 = vmatpush1.bf16.msra.mxu0 0
    %512 = vmatprep.subr.bf16.mxu0 0
    %513 = vmatpush1.bf16.msra.mxu0 0
    %514 = vmatprep.subr.bf16.mxu0 0
    %515 = vmatpush1.bf16.msra.mxu0 0
    %516 = vmatprep.subr.bf16.mxu0 0
    %517 = vmatpush1.bf16.msra.mxu0 0
    %518 = vmatprep.subr.bf16.mxu0 0
    %519 = vmatpush1.bf16.msra.mxu0 0
    %520 = vmatprep.subr.bf16.mxu0 0
    %521 = vmatpush1.bf16.msra.mxu0 0
    %522 = vmatprep.subr.bf16.mxu0 0
    %523 = vmatpush1.bf16.msra.mxu0 0
    %524 = vmatprep.mubr.bf16.mxu0 0
    %525 = vmatmul.mubr.bf16.gmra.mrb[0].mxu0 %v367
    %v526 = vpop.f32.mrb[0].mxu0
    %v527 = vadd.f32 %v320, %v526
    %v528 = vpop.f32.mrb[0].mxu0
    %v529 = vadd.f32 %v322, %v528
    %v530 = vpop.f32.mrb[0].mxu0
    %v531 = vpop.f32.mrb[0].mxu0
    %532 = vdwg.mxu0
    %v533 = vld [vmem:[%s3] sm:$0xff]
    %v535 = vlaneseq
    %v536 = vshrl.u32 %v535, 7
    %v537 = vsub.s32 0, %v536
    %v538 = vrot.slane %v533, %v537
    %v539 = vlaneseq
    %v540 = vshrl.u32 %v539, 7
    %v541 = vsub.s32 1, %v540
    %v542 = vrot.slane %v533, %v541
    %v543 = vlaneseq
    %v544 = vshrl.u32 %v543, 7
    %v545 = vsub.s32 2, %v544
    %v546 = vrot.slane %v533, %v545
    %v547 = vlaneseq
    %v548 = vshrl.u32 %v547, 7
    %v549 = vsub.s32 3, %v548
    %v550 = vrot.slane %v533, %v549
    %v551 = vlaneseq
    %v552 = vshrl.u32 %v551, 7
    %v553 = vsub.s32 4, %v552
    %v554 = vrot.slane %v533, %v553
    %v555 = vlaneseq
    %v556 = vshrl.u32 %v555, 7
    %v557 = vsub.s32 5, %v556
    %v558 = vrot.slane %v533, %v557
    %v559 = vlaneseq
    %v560 = vshrl.u32 %v559, 7
    %v561 = vsub.s32 6, %v560
    %v562 = vrot.slane %v533, %v561
    %v563 = vlaneseq
    %v564 = vshrl.u32 %v563, 7
    %v565 = vsub.s32 7, %v564
    %v566 = vrot.slane %v533, %v565
    %v575 = vadd.f32 %v404, %v538
    %v576 = vadd.f32 %v406, %v542
    %v577 = vadd.f32 %v445, %v546
    %v578 = vadd.f32 %v447, %v550
    %v579 = vadd.f32 %v486, %v554
    %v580 = vadd.f32 %v488, %v558
    %v581 = vadd.f32 %v527, %v562
    %v582 = vadd.f32 %v529, %v566
    %v583 = vmax.f32 %v575, 0.0
    %v584 = vmax.f32 %v576, 0.0
    %v585 = vmax.f32 %v577, 0.0
    %v586 = vmax.f32 %v578, 0.0
    %v587 = vmax.f32 %v579, 0.0
    %v588 = vmax.f32 %v580, 0.0
    %v589 = vmax.f32 %v581, 0.0
    %v590 = vmax.f32 %v582, 0.0
    %v591 = vpack.c.bf16 %v583, %v583
    %v592 = vpack.c.bf16 %v584, %v584
    %v593 = vpack.c.bf16 %v585, %v585
    %v594 = vpack.c.bf16 %v586, %v586
    %v595 = vpack.c.bf16 %v587, %v587
    %v596 = vpack.c.bf16 %v588, %v588
    %v597 = vpack.c.bf16 %v589, %v589
    %v598 = vpack.c.bf16 %v590, %v590
    %v599 = vld [vmem:[#allocation9] sm:$0xf]
    %v600 = vld [vmem:[#allocation9 + $0x4] sm:$0xf]
    %v601 = vld [vmem:[#allocation9 + $0x8] sm:$0xf]
    %v602 = vld [vmem:[#allocation9 + $0xc] sm:$0xf]
    %v603 = vld [vmem:[#allocation9 + $0x10] sm:$0xf]
    %v604 = vld [vmem:[#allocation9 + $0x14] sm:$0xf]
    %v605 = vld [vmem:[#allocation9 + $0x18] sm:$0xf]
    %v606 = vld [vmem:[#allocation9 + $0x1c] sm:$0xf]
    %v607 = vld [vmem:[#allocation9 + $0x20] sm:$0xf]
    %v608 = vld [vmem:[#allocation9 + $0x24] sm:$0xf]
    %v609 = vld [vmem:[#allocation9 + $0x28] sm:$0xf]
    %v610 = vld [vmem:[#allocation9 + $0x2c] sm:$0xf]
    %v611 = vld [vmem:[#allocation9 + $0x30] sm:$0xf]
    %v612 = vld [vmem:[#allocation9 + $0x34] sm:$0xf]
    %v613 = vld [vmem:[#allocation9 + $0x38] sm:$0xf]
    %v614 = vld [vmem:[#allocation9 + $0x3c] sm:$0xf]
    %v615 = vld [vmem:[#allocation9 + $0x40] sm:$0xf]
    %v616 = vld [vmem:[#allocation9 + $0x44] sm:$0xf]
    %v617 = vld [vmem:[#allocation9 + $0x48] sm:$0xf]
    %v618 = vld [vmem:[#allocation9 + $0x4c] sm:$0xf]
    %v619 = vld [vmem:[#allocation9 + $0x50] sm:$0xf]
    %v620 = vld [vmem:[#allocation9 + $0x54] sm:$0xf]
    %v621 = vld [vmem:[#allocation9 + $0x58] sm:$0xf]
    %v622 = vld [vmem:[#allocation9 + $0x5c] sm:$0xf]
    %v623 = vld [vmem:[#allocation9 + $0x60] sm:$0xf]
    %v624 = vld [vmem:[#allocation9 + $0x64] sm:$0xf]
    %v625 = vld [vmem:[#allocation9 + $0x68] sm:$0xf]
    %v626 = vld [vmem:[#allocation9 + $0x6c] sm:$0xf]
    %v627 = vld [vmem:[#allocation9 + $0x70] sm:$0xf]
    %v628 = vld [vmem:[#allocation9 + $0x74] sm:$0xf]
    %v629 = vld [vmem:[#allocation9 + $0x78] sm:$0xf]
    %v630 = vld [vmem:[#allocation9 + $0x7c] sm:$0xf]
    %v631 = vld [vmem:[#allocation9 + $0x80] sm:$0xf]
    %v632 = vld [vmem:[#allocation9 + $0x84] sm:$0xf]
    %v633 = vld [vmem:[#allocation9 + $0x88] sm:$0xf]
    %v634 = vld [vmem:[#allocation9 + $0x8c] sm:$0xf]
    %v635 = vld [vmem:[#allocation9 + $0x90] sm:$0xf]
    %v636 = vld [vmem:[#allocation9 + $0x94] sm:$0xf]
    %v637 = vld [vmem:[#allocation9 + $0x98] sm:$0xf]
    %v638 = vld [vmem:[#allocation9 + $0x9c] sm:$0xf]
    %v639 = vld [vmem:[#allocation9 + $0xa0] sm:$0xf]
    %v640 = vld [vmem:[#allocation9 + $0xa4] sm:$0xf]
    %v641 = vld [vmem:[#allocation9 + $0xa8] sm:$0xf]
    %v642 = vld [vmem:[#allocation9 + $0xac] sm:$0xf]
    %v643 = vld [vmem:[#allocation9 + $0xb0] sm:$0xf]
    %v644 = vld [vmem:[#allocation9 + $0xb4] sm:$0xf]
    %v645 = vld [vmem:[#allocation9 + $0xb8] sm:$0xf]
    %v646 = vld [vmem:[#allocation9 + $0xbc] sm:$0xf]
    %v647 = vld [vmem:[#allocation9 + $0xc0] sm:$0xf]
    %v648 = vld [vmem:[#allocation9 + $0xc4] sm:$0xf]
    %v649 = vld [vmem:[#allocation9 + $0xc8] sm:$0xf]
    %v650 = vld [vmem:[#allocation9 + $0xcc] sm:$0xf]
    %v651 = vld [vmem:[#allocation9 + $0xd0] sm:$0xf]
    %v652 = vld [vmem:[#allocation9 + $0xd4] sm:$0xf]
    %v653 = vld [vmem:[#allocation9 + $0xd8] sm:$0xf]
    %v654 = vld [vmem:[#allocation9 + $0xdc] sm:$0xf]
    %v655 = vld [vmem:[#allocation9 + $0xe0] sm:$0xf]
    %v656 = vld [vmem:[#allocation9 + $0xe4] sm:$0xf]
    %v657 = vld [vmem:[#allocation9 + $0xe8] sm:$0xf]
    %v658 = vld [vmem:[#allocation9 + $0xec] sm:$0xf]
    %v659 = vld [vmem:[#allocation9 + $0xf0] sm:$0xf]
    %v660 = vld [vmem:[#allocation9 + $0xf4] sm:$0xf]
    %v661 = vld [vmem:[#allocation9 + $0xf8] sm:$0xf]
    %v662 = vld [vmem:[#allocation9 + $0xfc] sm:$0xf]
    %v663 = vld [vmem:[#allocation9 + $0x100] sm:$0xf]
    %v664 = vld [vmem:[#allocation9 + $0x104] sm:$0xf]
    %v665 = vld [vmem:[#allocation9 + $0x108] sm:$0xf]
    %v666 = vld [vmem:[#allocation9 + $0x10c] sm:$0xf]
    %v667 = vld [vmem:[#allocation9 + $0x110] sm:$0xf]
    %v668 = vld [vmem:[#allocation9 + $0x114] sm:$0xf]
    %v669 = vld [vmem:[#allocation9 + $0x118] sm:$0xf]
    %v670 = vld [vmem:[#allocation9 + $0x11c] sm:$0xf]
    %v671 = vld [vmem:[#allocation9 + $0x120] sm:$0xf]
    %v672 = vld [vmem:[#allocation9 + $0x124] sm:$0xf]
    %v673 = vld [vmem:[#allocation9 + $0x128] sm:$0xf]
    %v674 = vld [vmem:[#allocation9 + $0x12c] sm:$0xf]
    %v675 = vld [vmem:[#allocation9 + $0x130] sm:$0xf]
    %v676 = vld [vmem:[#allocation9 + $0x134] sm:$0xf]
    %v677 = vld [vmem:[#allocation9 + $0x138] sm:$0xf]
    %v678 = vld [vmem:[#allocation9 + $0x13c] sm:$0xf]
    %v679 = vld [vmem:[#allocation9 + $0x140] sm:$0xf]
    %v680 = vld [vmem:[#allocation9 + $0x144] sm:$0xf]
    %v681 = vld [vmem:[#allocation9 + $0x148] sm:$0xf]
    %v682 = vld [vmem:[#allocation9 + $0x14c] sm:$0xf]
    %v683 = vld [vmem:[#allocation9 + $0x150] sm:$0xf]
    %v684 = vld [vmem:[#allocation9 + $0x154] sm:$0xf]
    %v685 = vld [vmem:[#allocation9 + $0x158] sm:$0xf]
    %v686 = vld [vmem:[#allocation9 + $0x15c] sm:$0xf]
    %v687 = vld [vmem:[#allocation9 + $0x160] sm:$0xf]
    %v688 = vld [vmem:[#allocation9 + $0x164] sm:$0xf]
    %v689 = vld [vmem:[#allocation9 + $0x168] sm:$0xf]
    %v690 = vld [vmem:[#allocation9 + $0x16c] sm:$0xf]
    %v691 = vld [vmem:[#allocation9 + $0x170] sm:$0xf]
    %v692 = vld [vmem:[#allocation9 + $0x174] sm:$0xf]
    %v693 = vld [vmem:[#allocation9 + $0x178] sm:$0xf]
    %v694 = vld [vmem:[#allocation9 + $0x17c] sm:$0xf]
    %v695 = vld [vmem:[#allocation9 + $0x180] sm:$0xf]
    %v696 = vld [vmem:[#allocation9 + $0x184] sm:$0xf]
    %v697 = vld [vmem:[#allocation9 + $0x188] sm:$0xf]
    %v698 = vld [vmem:[#allocation9 + $0x18c] sm:$0xf]
    %v699 = vld [vmem:[#allocation9 + $0x190] sm:$0xf]
    %v700 = vld [vmem:[#allocation9 + $0x194] sm:$0xf]
    %v701 = vld [vmem:[#allocation9 + $0x198] sm:$0xf]
    %v702 = vld [vmem:[#allocation9 + $0x19c] sm:$0xf]
    %v703 = vld [vmem:[#allocation9 + $0x1a0] sm:$0xf]
    %v704 = vld [vmem:[#allocation9 + $0x1a4] sm:$0xf]
    %v705 = vld [vmem:[#allocation9 + $0x1a8] sm:$0xf]
    %v706 = vld [vmem:[#allocation9 + $0x1ac] sm:$0xf]
    %v707 = vld [vmem:[#allocation9 + $0x1b0] sm:$0xf]
    %v708 = vld [vmem:[#allocation9 + $0x1b4] sm:$0xf]
    %v709 = vld [vmem:[#allocation9 + $0x1b8] sm:$0xf]
    %v710 = vld [vmem:[#allocation9 + $0x1bc] sm:$0xf]
    %v711 = vld [vmem:[#allocation9 + $0x1c0] sm:$0xf]
    %v712 = vld [vmem:[#allocation9 + $0x1c4] sm:$0xf]
    %v713 = vld [vmem:[#allocation9 + $0x1c8] sm:$0xf]
    %v714 = vld [vmem:[#allocation9 + $0x1cc] sm:$0xf]
    %v715 = vld [vmem:[#allocation9 + $0x1d0] sm:$0xf]
    %v716 = vld [vmem:[#allocation9 + $0x1d4] sm:$0xf]
    %v717 = vld [vmem:[#allocation9 + $0x1d8] sm:$0xf]
    %v718 = vld [vmem:[#allocation9 + $0x1dc] sm:$0xf]
    %v719 = vld [vmem:[#allocation9 + $0x1e0] sm:$0xf]
    %v720 = vld [vmem:[#allocation9 + $0x1e4] sm:$0xf]
    %v721 = vld [vmem:[#allocation9 + $0x1e8] sm:$0xf]
    %v722 = vld [vmem:[#allocation9 + $0x1ec] sm:$0xf]
    %v723 = vld [vmem:[#allocation9 + $0x1f0] sm:$0xf]
    %v724 = vld [vmem:[#allocation9 + $0x1f4] sm:$0xf]
    %v725 = vld [vmem:[#allocation9 + $0x1f8] sm:$0xf]
    %v726 = vld [vmem:[#allocation9 + $0x1fc] sm:$0xf]
    %v727 = vld [vmem:[%s5] sm:$0x1]
    %v729 = vlaneseq
    %v730 = vshrl.u32 %v729, 7
    %v731 = vsub.s32 0, %v730
    %v732 = vrot.slane %v727, %v731
    %v862 = vunpack.c.l.b16 %v599
    %v863 = vunpack.c.l.b16 %v600
    %v864 = vunpack.c.l.b16 %v601
    %v865 = vunpack.c.l.b16 %v602
    %v866 = vunpack.c.l.b16 %v603
    %v867 = vunpack.c.l.b16 %v604
    %v868 = vunpack.c.l.b16 %v605
    %v869 = vunpack.c.l.b16 %v606
    %v870 = vunpack.c.l.b16 %v607
    %v871 = vunpack.c.l.b16 %v608
    %v872 = vunpack.c.l.b16 %v609
    %v873 = vunpack.c.l.b16 %v610
    %v874 = vunpack.c.l.b16 %v611
    %v875 = vunpack.c.l.b16 %v612
    %v876 = vunpack.c.l.b16 %v613
    %v877 = vunpack.c.l.b16 %v614
    %v878 = vunpack.c.l.b16 %v615
    %v879 = vunpack.c.l.b16 %v616
    %v880 = vunpack.c.l.b16 %v617
    %v881 = vunpack.c.l.b16 %v618
    %v882 = vunpack.c.l.b16 %v619
    %v883 = vunpack.c.l.b16 %v620
    %v884 = vunpack.c.l.b16 %v621
    %v885 = vunpack.c.l.b16 %v622
    %v886 = vunpack.c.l.b16 %v623
    %v887 = vunpack.c.l.b16 %v624
    %v888 = vunpack.c.l.b16 %v625
    %v889 = vunpack.c.l.b16 %v626
    %v890 = vunpack.c.l.b16 %v627
    %v891 = vunpack.c.l.b16 %v628
    %v892 = vunpack.c.l.b16 %v629
    %v893 = vunpack.c.l.b16 %v630
    %v894 = vunpack.c.l.b16 %v631
    %v895 = vunpack.c.l.b16 %v632
    %v896 = vunpack.c.l.b16 %v633
    %v897 = vunpack.c.l.b16 %v634
    %v898 = vunpack.c.l.b16 %v635
    %v899 = vunpack.c.l.b16 %v636
    %v900 = vunpack.c.l.b16 %v637
    %v901 = vunpack.c.l.b16 %v638
    %v902 = vunpack.c.l.b16 %v639
    %v903 = vunpack.c.l.b16 %v640
    %v904 = vunpack.c.l.b16 %v641
    %v905 = vunpack.c.l.b16 %v642
    %v906 = vunpack.c.l.b16 %v643
    %v907 = vunpack.c.l.b16 %v644
    %v908 = vunpack.c.l.b16 %v645
    %v909 = vunpack.c.l.b16 %v646
    %v910 = vunpack.c.l.b16 %v647
    %v911 = vunpack.c.l.b16 %v648
    %v912 = vunpack.c.l.b16 %v649
    %v913 = vunpack.c.l.b16 %v650
    %v914 = vunpack.c.l.b16 %v651
    %v915 = vunpack.c.l.b16 %v652
    %v916 = vunpack.c.l.b16 %v653
    %v917 = vunpack.c.l.b16 %v654
    %v918 = vunpack.c.l.b16 %v655
    %v919 = vunpack.c.l.b16 %v656
    %v920 = vunpack.c.l.b16 %v657
    %v921 = vunpack.c.l.b16 %v658
    %v922 = vunpack.c.l.b16 %v659
    %v923 = vunpack.c.l.b16 %v660
    %v924 = vunpack.c.l.b16 %v661
    %v925 = vunpack.c.l.b16 %v662
    %v926 = vunpack.c.l.b16 %v663
    %v927 = vunpack.c.l.b16 %v664
    %v928 = vunpack.c.l.b16 %v665
    %v929 = vunpack.c.l.b16 %v666
    %v930 = vunpack.c.l.b16 %v667
    %v931 = vunpack.c.l.b16 %v668
    %v932 = vunpack.c.l.b16 %v669
    %v933 = vunpack.c.l.b16 %v670
    %v934 = vunpack.c.l.b16 %v671
    %v935 = vunpack.c.l.b16 %v672
    %v936 = vunpack.c.l.b16 %v673
    %v937 = vunpack.c.l.b16 %v674
    %v938 = vunpack.c.l.b16 %v675
    %v939 = vunpack.c.l.b16 %v676
    %v940 = vunpack.c.l.b16 %v677
    %v941 = vunpack.c.l.b16 %v678
    %v942 = vunpack.c.l.b16 %v679
    %v943 = vunpack.c.l.b16 %v680
    %v944 = vunpack.c.l.b16 %v681
    %v945 = vunpack.c.l.b16 %v682
    %v946 = vunpack.c.l.b16 %v683
    %v947 = vunpack.c.l.b16 %v684
    %v948 = vunpack.c.l.b16 %v685
    %v949 = vunpack.c.l.b16 %v686
    %v950 = vunpack.c.l.b16 %v687
    %v951 = vunpack.c.l.b16 %v688
    %v952 = vunpack.c.l.b16 %v689
    %v953 = vunpack.c.l.b16 %v690
    %v954 = vunpack.c.l.b16 %v691
    %v955 = vunpack.c.l.b16 %v692
    %v956 = vunpack.c.l.b16 %v693
    %v957 = vunpack.c.l.b16 %v694
    %v958 = vunpack.c.l.b16 %v695
    %v959 = vunpack.c.l.b16 %v696
    %v960 = vunpack.c.l.b16 %v697
    %v961 = vunpack.c.l.b16 %v698
    %v962 = vunpack.c.l.b16 %v699
    %v963 = vunpack.c.l.b16 %v700
    %v964 = vunpack.c.l.b16 %v701
    %v965 = vunpack.c.l.b16 %v702
    %v966 = vunpack.c.l.b16 %v703
    %v967 = vunpack.c.l.b16 %v704
    %v968 = vunpack.c.l.b16 %v705
    %v969 = vunpack.c.l.b16 %v706
    %v970 = vunpack.c.l.b16 %v707
    %v971 = vunpack.c.l.b16 %v708
    %v972 = vunpack.c.l.b16 %v709
    %v973 = vunpack.c.l.b16 %v710
    %v974 = vunpack.c.l.b16 %v711
    %v975 = vunpack.c.l.b16 %v712
    %v976 = vunpack.c.l.b16 %v713
    %v977 = vunpack.c.l.b16 %v714
    %v978 = vunpack.c.l.b16 %v715
    %v979 = vunpack.c.l.b16 %v716
    %v980 = vunpack.c.l.b16 %v717
    %v981 = vunpack.c.l.b16 %v718
    %v982 = vunpack.c.l.b16 %v719
    %v983 = vunpack.c.l.b16 %v720
    %v984 = vunpack.c.l.b16 %v721
    %v985 = vunpack.c.l.b16 %v722
    %v986 = vunpack.c.l.b16 %v723
    %v987 = vunpack.c.l.b16 %v724
    %v988 = vunpack.c.l.b16 %v725
    %v989 = vunpack.c.l.b16 %v726
    %v990 = vpack.c.b16 %v863, %v862
    %v991 = vpack.c.b16 %v865, %v864
    %v992 = vpack.c.b16 %v867, %v866
    %v993 = vpack.c.b16 %v869, %v868
    %v994 = vpack.c.b16 %v871, %v870
    %v995 = vpack.c.b16 %v873, %v872
    %v996 = vpack.c.b16 %v875, %v874
    %v997 = vpack.c.b16 %v877, %v876
    %v998 = vpack.c.b16 %v879, %v878
    %v999 = vpack.c.b16 %v881, %v880
    %v1000 = vpack.c.b16 %v883, %v882
    %v1001 = vpack.c.b16 %v885, %v884
    %v1002 = vpack.c.b16 %v887, %v886
    %v1003 = vpack.c.b16 %v889, %v888
    %v1004 = vpack.c.b16 %v891, %v890
    %v1005 = vpack.c.b16 %v893, %v892
    %v1006 = vpack.c.b16 %v895, %v894
    %v1007 = vpack.c.b16 %v897, %v896
    %v1008 = vpack.c.b16 %v899, %v898
    %v1009 = vpack.c.b16 %v901, %v900
    %v1010 = vpack.c.b16 %v903, %v902
    %v1011 = vpack.c.b16 %v905, %v904
    %v1012 = vpack.c.b16 %v907, %v906
    %v1013 = vpack.c.b16 %v909, %v908
    %v1014 = vpack.c.b16 %v911, %v910
    %v1015 = vpack.c.b16 %v913, %v912
    %v1016 = vpack.c.b16 %v915, %v914
    %v1017 = vpack.c.b16 %v917, %v916
    %v1018 = vpack.c.b16 %v919, %v918
    %v1019 = vpack.c.b16 %v921, %v920
    %v1020 = vpack.c.b16 %v923, %v922
    %v1021 = vpack.c.b16 %v925, %v924
    %v1022 = vpack.c.b16 %v927, %v926
    %v1023 = vpack.c.b16 %v929, %v928
    %v1024 = vpack.c.b16 %v931, %v930
    %v1025 = vpack.c.b16 %v933, %v932
    %v1026 = vpack.c.b16 %v935, %v934
    %v1027 = vpack.c.b16 %v937, %v936
    %v1028 = vpack.c.b16 %v939, %v938
    %v1029 = vpack.c.b16 %v941, %v940
    %v1030 = vpack.c.b16 %v943, %v942
    %v1031 = vpack.c.b16 %v945, %v944
    %v1032 = vpack.c.b16 %v947, %v946
    %v1033 = vpack.c.b16 %v949, %v948
    %v1034 = vpack.c.b16 %v951, %v950
    %v1035 = vpack.c.b16 %v953, %v952
    %v1036 = vpack.c.b16 %v955, %v954
    %v1037 = vpack.c.b16 %v957, %v956
    %v1038 = vpack.c.b16 %v959, %v958
    %v1039 = vpack.c.b16 %v961, %v960
    %v1040 = vpack.c.b16 %v963, %v962
    %v1041 = vpack.c.b16 %v965, %v964
    %v1042 = vpack.c.b16 %v967, %v966
    %v1043 = vpack.c.b16 %v969, %v968
    %v1044 = vpack.c.b16 %v971, %v970
    %v1045 = vpack.c.b16 %v973, %v972
    %v1046 = vpack.c.b16 %v975, %v974
    %v1047 = vpack.c.b16 %v977, %v976
    %v1048 = vpack.c.b16 %v979, %v978
    %v1049 = vpack.c.b16 %v981, %v980
    %v1050 = vpack.c.b16 %v983, %v982
    %v1051 = vpack.c.b16 %v985, %v984
    %v1052 = vpack.c.b16 %v987, %v986
    %v1053 = vpack.c.b16 %v989, %v988
    %1118 = vmatprep.subr.bf16.mxu0 0
    %1119 = vmatpush1.bf16.msra.mxu0 %v990
    %1120 = vmatprep.subr.bf16.mxu0 0
    %1121 = vmatpush1.bf16.msra.mxu0 %v991
    %1122 = vmatprep.subr.bf16.mxu0 0
    %1123 = vmatpush1.bf16.msra.mxu0 %v992
    %1124 = vmatprep.subr.bf16.mxu0 0
    %1125 = vmatpush1.bf16.msra.mxu0 %v993
    %1126 = vmatprep.subr.bf16.mxu0 0
    %1127 = vmatpush1.bf16.msra.mxu0 %v994
    %1128 = vmatprep.subr.bf16.mxu0 0
    %1129 = vmatpush1.bf16.msra.mxu0 %v995
    %1130 = vmatprep.subr.bf16.mxu0 0
    %1131 = vmatpush1.bf16.msra.mxu0 %v996
    %1132 = vmatprep.subr.bf16.mxu0 0
    %1133 = vmatpush1.bf16.msra.mxu0 %v997
    %1134 = vmatprep.subr.bf16.mxu0 0
    %1135 = vmatpush1.bf16.msra.mxu0 %v998
    %1136 = vmatprep.subr.bf16.mxu0 0
    %1137 = vmatpush1.bf16.msra.mxu0 %v999
    %1138 = vmatprep.subr.bf16.mxu0 0
    %1139 = vmatpush1.bf16.msra.mxu0 %v1000
    %1140 = vmatprep.subr.bf16.mxu0 0
    %1141 = vmatpush1.bf16.msra.mxu0 %v1001
    %1142 = vmatprep.subr.bf16.mxu0 0
    %1143 = vmatpush1.bf16.msra.mxu0 %v1002
    %1144 = vmatprep.subr.bf16.mxu0 0
    %1145 = vmatpush1.bf16.msra.mxu0 %v1003
    %1146 = vmatprep.subr.bf16.mxu0 0
    %1147 = vmatpush1.bf16.msra.mxu0 %v1004
    %1148 = vmatprep.subr.bf16.mxu0 0
    %1149 = vmatpush1.bf16.msra.mxu0 %v1005
    %1150 = vmatprep.mubr.bf16.mxu0 %v592
    %1151 = vmatmul.mubr.bf16.gmra.mrb[0].mxu0 %v591
    %v1152 = vpop.f32.mrb[0].mxu0
    %v1153 = vadd.f32 %v732, %v1152
    %v1154 = vpop.f32.mrb[0].mxu0
    %v1155 = vpop.f32.mrb[0].mxu0
    %v1156 = vpop.f32.mrb[0].mxu0
    %1157 = vdwg.mxu0
    %1158 = vmatprep.subr.bf16.mxu0 0
    %1159 = vmatpush1.bf16.msra.mxu0 %v1006
    %1160 = vmatprep.subr.bf16.mxu0 0
    %1161 = vmatpush1.bf16.msra.mxu0 %v1007
    %1162 = vmatprep.subr.bf16.mxu0 0
    %1163 = vmatpush1.bf16.msra.mxu0 %v1008
    %1164 = vmatprep.subr.bf16.mxu0 0
    %1165 = vmatpush1.bf16.msra.mxu0 %v1009
    %1166 = vmatprep.subr.bf16.mxu0 0
    %1167 = vmatpush1.bf16.msra.mxu0 %v1010
    %1168 = vmatprep.subr.bf16.mxu0 0
    %1169 = vmatpush1.bf16.msra.mxu0 %v1011
    %1170 = vmatprep.subr.bf16.mxu0 0
    %1171 = vmatpush1.bf16.msra.mxu0 %v1012
    %1172 = vmatprep.subr.bf16.mxu0 0
    %1173 = vmatpush1.bf16.msra.mxu0 %v1013
    %1174 = vmatprep.subr.bf16.mxu0 0
    %1175 = vmatpush1.bf16.msra.mxu0 %v1014
    %1176 = vmatprep.subr.bf16.mxu0 0
    %1177 = vmatpush1.bf16.msra.mxu0 %v1015
    %1178 = vmatprep.subr.bf16.mxu0 0
    %1179 = vmatpush1.bf16.msra.mxu0 %v1016
    %1180 = vmatprep.subr.bf16.mxu0 0
    %1181 = vmatpush1.bf16.msra.mxu0 %v1017
    %1182 = vmatprep.subr.bf16.mxu0 0
    %1183 = vmatpush1.bf16.msra.mxu0 %v1018
    %1184 = vmatprep.subr.bf16.mxu0 0
    %1185 = vmatpush1.bf16.msra.mxu0 %v1019
    %1186 = vmatprep.subr.bf16.mxu0 0
    %1187 = vmatpush1.bf16.msra.mxu0 %v1020
    %1188 = vmatprep.subr.bf16.mxu0 0
    %1189 = vmatpush1.bf16.msra.mxu0 %v1021
    %1190 = vmatprep.mubr.bf16.mxu0 %v594
    %1191 = vmatmul.mubr.bf16.gmra.mrb[0].mxu0 %v593
    %v1192 = vpop.f32.mrb[0].mxu0
    %v1193 = vadd.f32 %v1153, %v1192
    %v1194 = vpop.f32.mrb[0].mxu0
    %v1195 = vpop.f32.mrb[0].mxu0
    %v1196 = vpop.f32.mrb[0].mxu0
    %1197 = vdwg.mxu0
    %1198 = vmatprep.subr.bf16.mxu0 0
    %1199 = vmatpush1.bf16.msra.mxu0 %v1022
    %1200 = vmatprep.subr.bf16.mxu0 0
    %1201 = vmatpush1.bf16.msra.mxu0 %v1023
    %1202 = vmatprep.subr.bf16.mxu0 0
    %1203 = vmatpush1.bf16.msra.mxu0 %v1024
    %1204 = vmatprep.subr.bf16.mxu0 0
    %1205 = vmatpush1.bf16.msra.mxu0 %v1025
    %1206 = vmatprep.subr.bf16.mxu0 0
    %1207 = vmatpush1.bf16.msra.mxu0 %v1026
    %1208 = vmatprep.subr.bf16.mxu0 0
    %1209 = vmatpush1.bf16.msra.mxu0 %v1027
    %1210 = vmatprep.subr.bf16.mxu0 0
    %1211 = vmatpush1.bf16.msra.mxu0 %v1028
    %1212 = vmatprep.subr.bf16.mxu0 0
    %1213 = vmatpush1.bf16.msra.mxu0 %v1029
    %1214 = vmatprep.subr.bf16.mxu0 0
    %1215 = vmatpush1.bf16.msra.mxu0 %v1030
    %1216 = vmatprep.subr.bf16.mxu0 0
    %1217 = vmatpush1.bf16.msra.mxu0 %v1031
    %1218 = vmatprep.subr.bf16.mxu0 0
    %1219 = vmatpush1.bf16.msra.mxu0 %v1032
    %1220 = vmatprep.subr.bf16.mxu0 0
    %1221 = vmatpush1.bf16.msra.mxu0 %v1033
    %1222 = vmatprep.subr.bf16.mxu0 0
    %1223 = vmatpush1.bf16.msra.mxu0 %v1034
    %1224 = vmatprep.subr.bf16.mxu0 0
    %1225 = vmatpush1.bf16.msra.mxu0 %v1035
    %1226 = vmatprep.subr.bf16.mxu0 0
    %1227 = vmatpush1.bf16.msra.mxu0 %v1036
    %1228 = vmatprep.subr.bf16.mxu0 0
    %1229 = vmatpush1.bf16.msra.mxu0 %v1037
    %1230 = vmatprep.mubr.bf16.mxu0 %v596
    %1231 = vmatmul.mubr.bf16.gmra.mrb[0].mxu0 %v595
    %v1232 = vpop.f32.mrb[0].mxu0
    %v1233 = vadd.f32 %v1193, %v1232
    %v1234 = vpop.f32.mrb[0].mxu0
    %v1235 = vpop.f32.mrb[0].mxu0
    %v1236 = vpop.f32.mrb[0].mxu0
    %1237 = vdwg.mxu0
    %1238 = vmatprep.subr.bf16.mxu0 0
    %1239 = vmatpush1.bf16.msra.mxu0 %v1038
    %1240 = vmatprep.subr.bf16.mxu0 0
    %1241 = vmatpush1.bf16.msra.mxu0 %v1039
    %1242 = vmatprep.subr.bf16.mxu0 0
    %1243 = vmatpush1.bf16.msra.mxu0 %v1040
    %1244 = vmatprep.subr.bf16.mxu0 0
    %1245 = vmatpush1.bf16.msra.mxu0 %v1041
    %1246 = vmatprep.subr.bf16.mxu0 0
    %1247 = vmatpush1.bf16.msra.mxu0 %v1042
    %1248 = vmatprep.subr.bf16.mxu0 0
    %1249 = vmatpush1.bf16.msra.mxu0 %v1043
    %1250 = vmatprep.subr.bf16.mxu0 0
    %1251 = vmatpush1.bf16.msra.mxu0 %v1044
    %1252 = vmatprep.subr.bf16.mxu0 0
    %1253 = vmatpush1.bf16.msra.mxu0 %v1045
    %1254 = vmatprep.subr.bf16.mxu0 0
    %1255 = vmatpush1.bf16.msra.mxu0 %v1046
    %1256 = vmatprep.subr.bf16.mxu0 0
    %1257 = vmatpush1.bf16.msra.mxu0 %v1047
    %1258 = vmatprep.subr.bf16.mxu0 0
    %1259 = vmatpush1.bf16.msra.mxu0 %v1048
    %1260 = vmatprep.subr.bf16.mxu0 0
    %1261 = vmatpush1.bf16.msra.mxu0 %v1049
    %1262 = vmatprep.subr.bf16.mxu0 0
    %1263 = vmatpush1.bf16.msra.mxu0 %v1050
    %1264 = vmatprep.subr.bf16.mxu0 0
    %1265 = vmatpush1.bf16.msra.mxu0 %v1051
    %1266 = vmatprep.subr.bf16.mxu0 0
    %1267 = vmatpush1.bf16.msra.mxu0 %v1052
    %1268 = vmatprep.subr.bf16.mxu0 0
    %1269 = vmatpush1.bf16.msra.mxu0 %v1053
    %1270 = vmatprep.mubr.bf16.mxu0 %v598
    %1271 = vmatmul.mubr.bf16.gmra.mrb[0].mxu0 %v597
    %v1272 = vpop.f32.mrb[0].mxu0
    %v1273 = vadd.f32 %v1233, %v1272
    %v1274 = vpop.f32.mrb[0].mxu0
    %v1275 = vpop.f32.mrb[0].mxu0
    %v1276 = vpop.f32.mrb[0].mxu0
    %1277 = vdwg.mxu0
    %v1278 = vmax.f32 %v1273, 0.0
    %v1279 = vld [vmem:[%s6] sm:$0x1]
    %v1281 = vlaneseq
    %v1282 = vshrl.u32 %v1281, 7
    %v1283 = vsub.s32 0, %v1282
    %v1284 = vrot.slane %v1279, %v1283
    %v1286 = vmul.f32 %v1278, %v1284
    %1287 = vadd.xlane.f32.xlu0 %v1286
    %v1288 = vpop.xlane.xlu0 %1287
    %v1289 = vld [vmem:[#allocation2] sm:$0x1]
    %v1291 = vlaneseq
    %v1292 = vshrl.u32 %v1291, 7
    %v1293 = vsub.s32 0, %v1292
    %v1294 = vrot.slane %v1289, %v1293
    %v1296 = vadd.f32 %v1288, %v1294
    %v1297 = vxor.u32 %v1296, 2147483648
    %v1298 = vmul.f32 %v1297, 1.442695
    %v1299 = vpow.pop %v1298
    %v1300 = vadd.f32 %v1299, 1.0
    %v1301 = vrcp.pop %v1300
    %v1302 = vmul.f32 1.0, %v1301
    %1304 = vset.pattern.permute.xlu0 0
    %1305 = vperm.xlu0 %1304, %v1302
    %v1306 = vpop.permute.xlu0 %1305
    %1308 = vst [vmem:[#allocation11] sm:$0xff] %v1306
    // Predicated region
    $region50: #{tpu_custom_call.1} parent=1 // pred_check
      _
    $region51: #{tpu_custom_call.1} parent=1 // pred_check_branch
      %1310 = sbr.rel (0) target = $region53
    $region52: #{tpu_custom_call.1} parent=1 // pred_region
      %s1312 = ssub.s32 128, 128
      %1313 = vsyncadd [#allocation5], %s1312
      %s1315 = sshll.u32 [#allocation11], 4
      %s1316 = int_to_ptr.vmem [resolvable:$true] %s1315
      %1318 = dma.vmem_to_hbm [thread:$0]  %s1316, 128, %s8, [#allocation5]
    $region53: #{tpu_custom_call.1} parent=1 // pred_fallthru
      _
    // Predicated region
    $region54: #{tpu_custom_call.1} parent=1 // pred_check
      _
    $region55: #{tpu_custom_call.1} parent=1 // pred_check_branch
      %1320 = sbr.rel (0) target = $region57
    $region56: #{tpu_custom_call.1} parent=1 // pred_region
      %1321 = dma.done [#allocation5], 128
    $region57: #{tpu_custom_call.1} parent=1 // pred_fallthru
      _
    %1322 = vsyncpa [#allocation4], 1
    %1323 = vsyncpa [#allocation7], 1
    %1324 = vsyncpa [#allocation10], 1
    %1325 = vsyncpa [#allocation5], 1

</llo_original>
